<compile_context>
chip_gen: v7x
topology: tpu7x:2x2x1
jax: 0.10.0
libtpu: 0.0.40
codegen_flags: <defaults>
</compile_context>

<pallas_src>
import jax
import jax.numpy as jnp
from jax.experimental import pallas as pl
from jax.experimental.pallas import tpu as pltpu


def _round_up(n, m):
    return ((n + m - 1) // m) * m


def _vmem_tile_bytes(shape, dtype):
    """Bytes one VMEM buffer of `shape` occupies, incl. (sublane, lane) padding."""
    itemsize = jnp.dtype(dtype).itemsize
    packing = max(1, 4 // itemsize)                 # sub-32-bit sublane packing
    if len(shape) == 1:
        return _round_up(shape[0] * itemsize, 512)  # 1-D pads generously
    lane = _round_up(shape[-1], 128)
    sub = _round_up(shape[-2], 8 * packing)
    lead = 1
    for d in shape[:-2]:
        lead *= int(d)
    return lead * sub * lane * itemsize


def _mlp_kernel(xT_ref, w1_ref, b1_ref, w2_ref, b2_ref, w3_ref, b3_ref,
                wo_ref, bo_ref, oT_ref):
    """Fused 4-layer MLP, transposed layout: everything is (features, batch).

    Matmuls accumulate in f32; bias add + ReLU stay in f32, then (when the
    compute dtype is bf16) re-pack for the next MXU push.
    """
    cdt = w1_ref.dtype  # compute dtype for the MXU inputs

    h = jnp.dot(w1_ref[...], xT_ref[...], preferred_element_type=jnp.float32)
    h = jnp.maximum(h + b1_ref[...], 0.0).astype(cdt)

    h = jnp.dot(w2_ref[...], h, preferred_element_type=jnp.float32)
    h = jnp.maximum(h + b2_ref[...], 0.0).astype(cdt)

    h = jnp.dot(w3_ref[...], h, preferred_element_type=jnp.float32)
    h = jnp.maximum(h + b3_ref[...], 0.0).astype(cdt)

    out = jnp.dot(wo_ref[...], h, preferred_element_type=jnp.float32)
    out = jnp.maximum(out + bo_ref[...], 0.0)
    oT_ref[...] = out.astype(oT_ref.dtype)


def _xla_forward(x, params, compute_dtype):
    """Small-batch fast path: plain XLA dot chain, same mixed precision."""
    h = x.astype(compute_dtype)
    n = len(params)
    for i, (w, b) in enumerate(params):
        acc = jnp.dot(h, w.astype(compute_dtype).T,
                      preferred_element_type=jnp.float32)
        acc = jnp.maximum(acc + b.astype(jnp.float32)[None, :], 0.0)
        h = acc if i == n - 1 else acc.astype(compute_dtype)
    return h


def simplenet_forward(x, params, *, batch_tile=None,
                      compute_dtype=jnp.float32, use_pallas=None):
    """Run SimpleNet.  params = [(w, b)] * 4 with PyTorch Linear shapes
    (out_features, in_features) / (out_features,)."""
    (w1, b1), (w2, b2), (w3, b3), (wo, bo) = params
    B, in_dim = x.shape
    h1, h2, h3 = w1.shape[0], w2.shape[0], w3.shape[0]
    target_size = wo.shape[0]

    # --- Small-batch fast path: launch + grid overhead beats four tiny dots.
    if use_pallas is None:
        use_pallas = B >= 256
    if not use_pallas:
        return _xla_forward(x, params, compute_dtype)

    # --- Pad the tiny output feature dim up to a multiple of 8 sublanes.
    out_pad = _round_up(target_size, 8)
    if out_pad != target_size:
        wo = jnp.pad(wo, ((0, out_pad - target_size), (0, 0)))
        bo = jnp.pad(bo, ((0, out_pad - target_size),))

    # --- Batch tiling: batch is the lane axis, so tiles are multiples of 128.
    # Default: big tiles (cap 2048 rows), but at least 2 grid steps when the
    # batch spans more than one tile so both v7x TensorCores get work.
    if batch_tile is None:
        batch_tile = max(128, min(_round_up(pl.cdiv(B, 2), 128), 2048))
    else:
        batch_tile = _round_up(int(batch_tile), 128)
    B_pad = _round_up(B, batch_tile)
    if B_pad != B:
        x = jnp.pad(x, ((0, B_pad - B), (0, 0)))

    # --- Transpose so batch is the minor (lane) axis; cast to compute dtype.
    xT = x.astype(compute_dtype).T                        # (in_dim, B_pad)
    w1c, w2c, w3c, woc = (w.astype(compute_dtype) for w in (w1, w2, w3, wo))
    b1c, b2c, b3c, boc = (b.astype(jnp.float32).reshape(-1, 1)
                          for b in (b1, b2, b3, bo))      # (out, 1) f32

    grid = (B_pad // batch_tile,)

    def batch_map(i):
        return (0, i)

    def fixed_map(i):
        return (0, 0)

    fixed_arrays = (w1c, b1c, w2c, b2c, w3c, b3c, woc, boc)
    in_specs = [pl.BlockSpec((in_dim, batch_tile), batch_map)]
    in_specs += [pl.BlockSpec(a.shape, fixed_map) for a in fixed_arrays]
    out_specs = pl.BlockSpec((out_pad, batch_tile), batch_map)

    # --- VMEM budget, accounting for (sublane, lane) tile padding.
    weight_bytes = sum(_vmem_tile_bytes(a.shape, a.dtype) for a in fixed_arrays)
    io_bytes = (2 * _vmem_tile_bytes((in_dim, batch_tile), compute_dtype)
                + 2 * _vmem_tile_bytes((out_pad, batch_tile), jnp.float32))
    h_max = max(h1, h2, h3, out_pad)
    act_bytes = 4 * _vmem_tile_bytes((h_max, batch_tile), jnp.float32)
    need = 2 * weight_bytes + io_bytes + act_bytes
    # Floor at the common default (32 MiB), cap at 48 MiB (< v7x 64 MiB phys).
    vmem_limit = int(min(max(2 * need, 32 * 1024 * 1024), 48 * 1024 * 1024))

    # --- Advisory cost estimate (true feature widths, not padded ones).
    cd_itemsize = jnp.dtype(compute_dtype).itemsize
    flops = 2 * B_pad * (in_dim * h1 + h1 * h2 + h2 * h3 + h3 * target_size)
    bytes_accessed = (in_dim * B_pad * cd_itemsize
                      + sum(int(a.size) * a.dtype.itemsize for a in fixed_arrays)
                      + out_pad * B_pad * 4)
    cost = pl.CostEstimate(flops=flops, transcendentals=0,
                           bytes_accessed=bytes_accessed)

    outT = pl.pallas_call(
        _mlp_kernel,
        out_shape=jax.ShapeDtypeStruct((out_pad, B_pad), jnp.float32),
        grid_spec=pltpu.PrefetchScalarGridSpec(
            num_scalar_prefetch=0,
            grid=grid,
            in_specs=in_specs,
            out_specs=out_specs,
        ),
        compiler_params=pltpu.CompilerParams(
            dimension_semantics=("parallel",),
            vmem_limit_bytes=vmem_limit,
        ),
        cost_estimate=cost,
    )(xT, *fixed_arrays)

    # Slice off feature/batch padding and return (B, target_size).
    return outT[:target_size, :B].T


def init_params(key, input_size, h1, h2, h3, target_size):
    """Deterministic synthetic parameters in PyTorch Linear layout."""
    dims = [(input_size, h1), (h1, h2), (h2, h3), (h3, target_size)]
    params = []
    for i, (d_in, d_out) in enumerate(dims):
        kw, kb = jax.random.split(jax.random.fold_in(key, i))
        scale = 1.0 / jnp.sqrt(jnp.float32(d_in))
        w = jax.random.uniform(kw, (d_out, d_in), jnp.float32, -scale, scale)
        b = jax.random.uniform(kb, (d_out,), jnp.float32, -scale, scale)
        params.append((w, b))
    return params


def reference_forward(x, params):
    """Pure f32 JAX reference of the PyTorch module (ReLU after every block)."""
    h = x
    for w, b in params:
        h = jnp.maximum(
            jnp.dot(h, w.T, precision=jax.lax.Precision.HIGHEST) + b[None, :],
            0.0)
    return h


if __name__ == "__main__":
    # Small shapes consistent with the module: input_size=8, three hidden
    # layers of 32, target_size=4.
    batch, input_size = 16, 8
    h1 = h2 = h3 = 32
    target_size = 4

    key = jax.random.PRNGKey(0)
    kx, kp = jax.random.split(key)
    params = init_params(kp, input_size, h1, h2, h3, target_size)

    # 1) Small batch, Pallas path forced so the kernel itself is exercised.
    x_small = jax.random.normal(kx, (batch, input_size), jnp.float32)
    out_small = jax.block_until_ready(
        simplenet_forward(x_small, params, use_pallas=True))
    ref_small = reference_forward(x_small, params)
    assert out_small.shape == (batch, target_size)
    assert jnp.allclose(out_small, ref_small, atol=1e-2, rtol=1e-2), \
        "pallas (small batch) mismatch vs reference"

    # 2) Default dispatch at small batch -> XLA fast path; must agree too.
    out_fast = jax.block_until_ready(simplenet_forward(x_small, params))
    assert jnp.allclose(out_fast, ref_small, atol=1e-2, rtol=1e-2), \
        "fast path mismatch vs reference"

    # 3) Larger batch -> multi-step grid (2 parallel steps on v7x).
    x_big = jax.random.normal(jax.random.fold_in(kx, 1), (384, input_size),
                              jnp.float32)
    out_big = jax.block_until_ready(simplenet_forward(x_big, params))
    ref_big = reference_forward(x_big, params)
    assert out_big.shape == (384, target_size)
    assert jnp.allclose(out_big, ref_big, atol=1e-2, rtol=1e-2), \
        "pallas (large batch) mismatch vs reference"

    print("KERNEL_OK")
</pallas_src>

<mosaic_0001>
module attributes {stable_mosaic.version = 11 : i64} {
  func.func @_mlp_kernel(%arg0: i32, %arg1: memref<8x128xf32, #tpu.memory_space<vmem>>, %arg2: memref<32x8xf32, #tpu.memory_space<vmem>>, %arg3: memref<32x1xf32, #tpu.memory_space<vmem>>, %arg4: memref<32x32xf32, #tpu.memory_space<vmem>>, %arg5: memref<32x1xf32, #tpu.memory_space<vmem>>, %arg6: memref<32x32xf32, #tpu.memory_space<vmem>>, %arg7: memref<32x1xf32, #tpu.memory_space<vmem>>, %arg8: memref<8x32xf32, #tpu.memory_space<vmem>>, %arg9: memref<8x1xf32, #tpu.memory_space<vmem>>, %arg10: memref<8x128xf32, #tpu.memory_space<vmem>>) attributes {dimension_semantics = [#tpu.dimension_semantics<parallel>], iteration_bounds = array<i64: 1>, scalar_prefetch = 0 : i64, scratch_operands = 0 : i64, tpu.core_type = #tpu.core_type<tc>, window_params = [{transform_indices = @transform_0, window_bounds = array<i64: 8, 128>}, {pipeline_mode = #tpu.pipeline_mode<synchronous>, transform_indices = @transform_1, window_bounds = array<i64: 32, 8>}, {pipeline_mode = #tpu.pipeline_mode<synchronous>, transform_indices = @transform_2, window_bounds = array<i64: 32, 1>}, {pipeline_mode = #tpu.pipeline_mode<synchronous>, transform_indices = @transform_3, window_bounds = array<i64: 32, 32>}, {pipeline_mode = #tpu.pipeline_mode<synchronous>, transform_indices = @transform_4, window_bounds = array<i64: 32, 1>}, {pipeline_mode = #tpu.pipeline_mode<synchronous>, transform_indices = @transform_5, window_bounds = array<i64: 32, 32>}, {pipeline_mode = #tpu.pipeline_mode<synchronous>, transform_indices = @transform_6, window_bounds = array<i64: 32, 1>}, {pipeline_mode = #tpu.pipeline_mode<synchronous>, transform_indices = @transform_7, window_bounds = array<i64: 8, 32>}, {pipeline_mode = #tpu.pipeline_mode<synchronous>, transform_indices = @transform_8, window_bounds = array<i64: 8, 1>}, {transform_indices = @transform_9, window_bounds = array<i64: 8, 128>}]} {
    %c0 = arith.constant 0 : index
    %c0_0 = arith.constant 0 : index
    %0 = vector.load %arg2[%c0, %c0_0] : memref<32x8xf32, #tpu.memory_space<vmem>>, vector<32x8xf32>
    %c0_1 = arith.constant 0 : index
    %c0_2 = arith.constant 0 : index
    %1 = vector.load %arg1[%c0_1, %c0_2] : memref<8x128xf32, #tpu.memory_space<vmem>>, vector<8x128xf32>
    %cst = arith.constant dense<0.000000e+00> : vector<32x128xf32>
    %2 = tpu.matmul %0, %1, %cst {dimension_numbers = #tpu.dot_dimension_numbers<[1], [0], [0], [1], [0, 0, 1, 1], [], []>} : vector<32x8xf32>, vector<8x128xf32>, vector<32x128xf32> -> vector<32x128xf32>
    %c0_3 = arith.constant 0 : index
    %c0_4 = arith.constant 0 : index
    %3 = vector.load %arg3[%c0_3, %c0_4] : memref<32x1xf32, #tpu.memory_space<vmem>>, vector<32x1xf32>
    %4 = vector.broadcast %3 : vector<32x1xf32> to vector<32x128xf32>
    %5 = arith.addf %2, %4 : vector<32x128xf32>
    %cst_5 = arith.constant 0.000000e+00 : f32
    %6 = vector.broadcast %cst_5 : f32 to vector<32x128xf32>
    %7 = arith.maximumf %5, %6 : vector<32x128xf32>
    %c0_6 = arith.constant 0 : index
    %c0_7 = arith.constant 0 : index
    %8 = vector.load %arg4[%c0_6, %c0_7] : memref<32x32xf32, #tpu.memory_space<vmem>>, vector<32x32xf32>
    %cst_8 = arith.constant dense<0.000000e+00> : vector<32x128xf32>
    %9 = tpu.matmul %8, %7, %cst_8 {dimension_numbers = #tpu.dot_dimension_numbers<[1], [0], [0], [1], [0, 0, 1, 1], [], []>} : vector<32x32xf32>, vector<32x128xf32>, vector<32x128xf32> -> vector<32x128xf32>
    %c0_9 = arith.constant 0 : index
    %c0_10 = arith.constant 0 : index
    %10 = vector.load %arg5[%c0_9, %c0_10] : memref<32x1xf32, #tpu.memory_space<vmem>>, vector<32x1xf32>
    %11 = vector.broadcast %10 : vector<32x1xf32> to vector<32x128xf32>
    %12 = arith.addf %9, %11 : vector<32x128xf32>
    %cst_11 = arith.constant 0.000000e+00 : f32
    %13 = vector.broadcast %cst_11 : f32 to vector<32x128xf32>
    %14 = arith.maximumf %12, %13 : vector<32x128xf32>
    %c0_12 = arith.constant 0 : index
    %c0_13 = arith.constant 0 : index
    %15 = vector.load %arg6[%c0_12, %c0_13] : memref<32x32xf32, #tpu.memory_space<vmem>>, vector<32x32xf32>
    %cst_14 = arith.constant dense<0.000000e+00> : vector<32x128xf32>
    %16 = tpu.matmul %15, %14, %cst_14 {dimension_numbers = #tpu.dot_dimension_numbers<[1], [0], [0], [1], [0, 0, 1, 1], [], []>} : vector<32x32xf32>, vector<32x128xf32>, vector<32x128xf32> -> vector<32x128xf32>
    %c0_15 = arith.constant 0 : index
    %c0_16 = arith.constant 0 : index
    %17 = vector.load %arg7[%c0_15, %c0_16] : memref<32x1xf32, #tpu.memory_space<vmem>>, vector<32x1xf32>
    %18 = vector.broadcast %17 : vector<32x1xf32> to vector<32x128xf32>
    %19 = arith.addf %16, %18 : vector<32x128xf32>
    %cst_17 = arith.constant 0.000000e+00 : f32
    %20 = vector.broadcast %cst_17 : f32 to vector<32x128xf32>
    %21 = arith.maximumf %19, %20 : vector<32x128xf32>
    %c0_18 = arith.constant 0 : index
    %c0_19 = arith.constant 0 : index
    %22 = vector.load %arg8[%c0_18, %c0_19] : memref<8x32xf32, #tpu.memory_space<vmem>>, vector<8x32xf32>
    %cst_20 = arith.constant dense<0.000000e+00> : vector<8x128xf32>
    %23 = tpu.matmul %22, %21, %cst_20 {dimension_numbers = #tpu.dot_dimension_numbers<[1], [0], [0], [1], [0, 0, 1, 1], [], []>} : vector<8x32xf32>, vector<32x128xf32>, vector<8x128xf32> -> vector<8x128xf32>
    %c0_21 = arith.constant 0 : index
    %c0_22 = arith.constant 0 : index
    %24 = vector.load %arg9[%c0_21, %c0_22] : memref<8x1xf32, #tpu.memory_space<vmem>>, vector<8x1xf32>
    %25 = vector.broadcast %24 : vector<8x1xf32> to vector<8x128xf32>
    %26 = arith.addf %23, %25 : vector<8x128xf32>
    %cst_23 = arith.constant 0.000000e+00 : f32
    %27 = vector.broadcast %cst_23 : f32 to vector<8x128xf32>
    %28 = arith.maximumf %26, %27 : vector<8x128xf32>
    %c0_24 = arith.constant 0 : index
    %c0_25 = arith.constant 0 : index
    %29 = vector.load %arg10[%c0_24, %c0_25] : memref<8x128xf32, #tpu.memory_space<vmem>>, vector<8x128xf32>
    tpu.vector_store %arg10[%c0_24, %c0_25], %28 {strides = array<i32>} : memref<8x128xf32, #tpu.memory_space<vmem>>, vector<8x128xf32>,
    return
  }
  func.func @transform_0(%arg0: i32) -> (i32, i32) {
    %c0_i32 = arith.constant 0 : i32
    %c0_i32_0 = arith.constant 0 : i32
    return %c0_i32, %arg0 : i32, i32
  }
  func.func @transform_1(%arg0: i32) -> (i32, i32) {
    %c0_i32 = arith.constant 0 : i32
    %c0_i32_0 = arith.constant 0 : i32
    %c0_i32_1 = arith.constant 0 : i32
    return %c0_i32, %c0_i32_0 : i32, i32
  }
  func.func @transform_2(%arg0: i32) -> (i32, i32) {
    %c0_i32 = arith.constant 0 : i32
    %c0_i32_0 = arith.constant 0 : i32
    %c0_i32_1 = arith.constant 0 : i32
    return %c0_i32, %c0_i32_0 : i32, i32
  }
  func.func @transform_3(%arg0: i32) -> (i32, i32) {
    %c0_i32 = arith.constant 0 : i32
    %c0_i32_0 = arith.constant 0 : i32
    %c0_i32_1 = arith.constant 0 : i32
    return %c0_i32, %c0_i32_0 : i32, i32
  }
  func.func @transform_4(%arg0: i32) -> (i32, i32) {
    %c0_i32 = arith.constant 0 : i32
    %c0_i32_0 = arith.constant 0 : i32
    %c0_i32_1 = arith.constant 0 : i32
    return %c0_i32, %c0_i32_0 : i32, i32
  }
  func.func @transform_5(%arg0: i32) -> (i32, i32) {
    %c0_i32 = arith.constant 0 : i32
    %c0_i32_0 = arith.constant 0 : i32
    %c0_i32_1 = arith.constant 0 : i32
    return %c0_i32, %c0_i32_0 : i32, i32
  }
  func.func @transform_6(%arg0: i32) -> (i32, i32) {
    %c0_i32 = arith.constant 0 : i32
    %c0_i32_0 = arith.constant 0 : i32
    %c0_i32_1 = arith.constant 0 : i32
    return %c0_i32, %c0_i32_0 : i32, i32
  }
  func.func @transform_7(%arg0: i32) -> (i32, i32) {
    %c0_i32 = arith.constant 0 : i32
    %c0_i32_0 = arith.constant 0 : i32
    %c0_i32_1 = arith.constant 0 : i32
    return %c0_i32, %c0_i32_0 : i32, i32
  }
  func.func @transform_8(%arg0: i32) -> (i32, i32) {
    %c0_i32 = arith.constant 0 : i32
    %c0_i32_0 = arith.constant 0 : i32
    %c0_i32_1 = arith.constant 0 : i32
    return %c0_i32, %c0_i32_0 : i32, i32
  }
  func.func @transform_9(%arg0: i32) -> (i32, i32) {
    %c0_i32 = arith.constant 0 : i32
    %c0_i32_0 = arith.constant 0 : i32
    return %c0_i32, %arg0 : i32, i32
  }
}

</mosaic_0001>

<llo_original>
// kernel: tpu_custom_call.1
$region0: #{tpu_custom_call.1}
  #allocation0 [shape = 'u32[]', space=smem, size = 0x4, offset = 0x4, fixed_abs, tag = 'smem constant byte address 0x4 - core index']
  #allocation1 [shape = 'u32[144,128]{1,0:T(1,128)}', space=vmem, size = 0x12000, scoped, tag = 'internal scratch']
  %s0 = inlined_call_operand.vmem [shape: f32[8,128], index: 0, kind: input, shape index: {}]
  %s1 = inlined_call_operand.vmem [shape: f32[32,8], index: 1, kind: input, shape index: {}]
  %s2 = inlined_call_operand.vmem [shape: f32[32,1], index: 2, kind: input, shape index: {}]
  %s3 = inlined_call_operand.vmem [shape: f32[32,32], index: 3, kind: input, shape index: {}]
  %s4 = inlined_call_operand.vmem [shape: f32[32,1], index: 4, kind: input, shape index: {}]
  %s5 = inlined_call_operand.vmem [shape: f32[32,32], index: 5, kind: input, shape index: {}]
  %s6 = inlined_call_operand.vmem [shape: f32[32,1], index: 6, kind: input, shape index: {}]
  %s7 = inlined_call_operand.vmem [shape: f32[8,32], index: 7, kind: input, shape index: {}]
  %s8 = inlined_call_operand.vmem [shape: f32[8,1], index: 8, kind: input, shape index: {}]
  %s9 = inlined_call_operand.hbm [shape: f32[8,128], index: 9, kind: output, shape index: {}]
  %s10 = sld [smem:[#allocation0]]
  $region46: #{tpu_custom_call.1} parent=0
    _
  %s12 = ssub.s32 1, %s10
  %s13 = scalar_select 0, %s12, %s10
  $region1: #{tpu_custom_call.1} parent=0
    #allocation2 [shape = 'u8[4096]{0}', space=vmem, size = 0x1000, scoped, tag = 'output window, operand 0, single buffered']
    #allocation3 [shape = 's32[1]{0}', space=sflag, size = 0x4, scoped, tag = 'scoped memory for tpu_custom_call.1']
    %14 = vsyncpa [#allocation3], 0
    // Predicated region
    $region2: #{tpu_custom_call.1} parent=1 // pred_check
      _
    $region3: #{tpu_custom_call.1} parent=1 // pred_check_branch
      %16 = sbr.rel (0) target = $region5
    $region4: #{tpu_custom_call.1} parent=1 // pred_region
      _
    $region5: #{tpu_custom_call.1} parent=1 // pred_fallthru
      _
    // Predicated region
    $region6: #{tpu_custom_call.1} parent=1 // pred_check
      _
    $region7: #{tpu_custom_call.1} parent=1 // pred_check_branch
      %18 = sbr.rel (0) target = $region9
    $region8: #{tpu_custom_call.1} parent=1 // pred_region
      _
    $region9: #{tpu_custom_call.1} parent=1 // pred_fallthru
      _
    // Predicated region
    $region10: #{tpu_custom_call.1} parent=1 // pred_check
      _
    $region11: #{tpu_custom_call.1} parent=1 // pred_check_branch
      %20 = sbr.rel (0) target = $region13
    $region12: #{tpu_custom_call.1} parent=1 // pred_region
      _
    $region13: #{tpu_custom_call.1} parent=1 // pred_fallthru
      _
    // Predicated region
    $region14: #{tpu_custom_call.1} parent=1 // pred_check
      _
    $region15: #{tpu_custom_call.1} parent=1 // pred_check_branch
      %22 = sbr.rel (0) target = $region17
    $region16: #{tpu_custom_call.1} parent=1 // pred_region
      _
    $region17: #{tpu_custom_call.1} parent=1 // pred_fallthru
      _
    // Predicated region
    $region18: #{tpu_custom_call.1} parent=1 // pred_check
      _
    $region19: #{tpu_custom_call.1} parent=1 // pred_check_branch
      %24 = sbr.rel (0) target = $region21
    $region20: #{tpu_custom_call.1} parent=1 // pred_region
      _
    $region21: #{tpu_custom_call.1} parent=1 // pred_fallthru
      _
    // Predicated region
    $region22: #{tpu_custom_call.1} parent=1 // pred_check
      _
    $region23: #{tpu_custom_call.1} parent=1 // pred_check_branch
      %26 = sbr.rel (0) target = $region25
    $region24: #{tpu_custom_call.1} parent=1 // pred_region
      _
    $region25: #{tpu_custom_call.1} parent=1 // pred_fallthru
      _
    // Predicated region
    $region26: #{tpu_custom_call.1} parent=1 // pred_check
      _
    $region27: #{tpu_custom_call.1} parent=1 // pred_check_branch
      %28 = sbr.rel (0) target = $region29
    $region28: #{tpu_custom_call.1} parent=1 // pred_region
      _
    $region29: #{tpu_custom_call.1} parent=1 // pred_fallthru
      _
    // Predicated region
    $region30: #{tpu_custom_call.1} parent=1 // pred_check
      _
    $region31: #{tpu_custom_call.1} parent=1 // pred_check_branch
      %30 = sbr.rel (0) target = $region33
    $region32: #{tpu_custom_call.1} parent=1 // pred_region
      _
    $region33: #{tpu_custom_call.1} parent=1 // pred_fallthru
      _
    // Predicated region
    $region34: #{tpu_custom_call.1} parent=1 // pred_check
      _
    $region35: #{tpu_custom_call.1} parent=1 // pred_check_branch
      %32 = sbr.rel (0) target = $region37
    $region36: #{tpu_custom_call.1} parent=1 // pred_region
      _
    $region37: #{tpu_custom_call.1} parent=1 // pred_fallthru
      _
    %v33 = vld [vmem:[%s1] sm:$0xff]
    %v34 = vld [vmem:[%s1 + $0x8] sm:$0xff]
    %v35 = vld [vmem:[%s1 + $0x10] sm:$0xff]
    %v36 = vld [vmem:[%s1 + $0x18] sm:$0xff]
    %v37 = vld [vmem:[%s0] sm:$0xff]
    %v38 = vld [vmem:[%s2] sm:$0xff]
    %v39 = vld [vmem:[%s2 + $0x8] sm:$0xff]
    %v40 = vld [vmem:[%s2 + $0x10] sm:$0xff]
    %v41 = vld [vmem:[%s2 + $0x18] sm:$0xff]
    %43 = vset.pattern.permute.xlu0 0
    %44 = vperm.xlu0 %43, %v38
    %v45 = vpop.permute.xlu0 %44
    %48 = vset.pattern.permute.xlu0 0
    %49 = vperm.xlu0 %48, %v39
    %v50 = vpop.permute.xlu0 %49
    %53 = vset.pattern.permute.xlu0 0
    %54 = vperm.xlu0 %53, %v40
    %v55 = vpop.permute.xlu0 %54
    %58 = vset.pattern.permute.xlu0 0
    %59 = vperm.xlu0 %58, %v41
    %v60 = vpop.permute.xlu0 %59
    %vm62 = vcmask 64512
    %v64 = vsel %vm62, %v33, 0
    %v67 = vsel %vm62, %v34, 0
    %v70 = vsel %vm62, %v35, 0
    %v73 = vsel %vm62, %v36, 0
    %75 = vmatprep.subr.mxu0 0.0
    %76 = vmatpush1.msra.mxu0 %v37
    %77 = vmatprep.subr.mxu0 0.0
    %78 = vmatpush1.msra.mxu0 0.0
    %79 = vmatprep.subr.mxu0 0.0
    %80 = vmatpush1.msra.mxu0 0.0
    %81 = vmatprep.subr.mxu0 0.0
    %82 = vmatpush1.msra.mxu0 0.0
    %83 = vmatprep.subr.mxu0 0.0
    %84 = vmatpush1.msra.mxu0 0.0
    %85 = vmatprep.subr.mxu0 0.0
    %86 = vmatpush1.msra.mxu0 0.0
    %87 = vmatprep.subr.mxu0 0.0
    %88 = vmatpush1.msra.mxu0 0.0
    %89 = vmatprep.subr.mxu0 0.0
    %90 = vmatpush1.msra.mxu0 0.0
    %91 = vmatprep.subr.mxu0 0.0
    %92 = vmatpush1.msra.mxu0 0.0
    %93 = vmatprep.subr.mxu0 0.0
    %94 = vmatpush1.msra.mxu0 0.0
    %95 = vmatprep.subr.mxu0 0.0
    %96 = vmatpush1.msra.mxu0 0.0
    %97 = vmatprep.subr.mxu0 0.0
    %98 = vmatpush1.msra.mxu0 0.0
    %99 = vmatprep.subr.mxu0 0.0
    %100 = vmatpush1.msra.mxu0 0.0
    %101 = vmatprep.subr.mxu0 0.0
    %102 = vmatpush1.msra.mxu0 0.0
    %103 = vmatprep.subr.mxu0 0.0
    %104 = vmatpush1.msra.mxu0 0.0
    %105 = vmatprep.subr.mxu0 0.0
    %106 = vmatpush1.msra.mxu0 0.0
    %107 = vmatprep.subr.mxu0 0.0
    %108 = vmatpush1.msra.mxu0 0.0
    %109 = vmatprep.subr.mxu0 0.0
    %110 = vmatpush1.msra.mxu0 0.0
    %111 = vmatprep.subr.mxu0 0.0
    %112 = vmatpush1.msra.mxu0 0.0
    %113 = vmatprep.subr.mxu0 0.0
    %114 = vmatpush1.msra.mxu0 0.0
    %115 = vmatprep.subr.mxu0 0.0
    %116 = vmatpush1.msra.mxu0 0.0
    %117 = vmatprep.subr.mxu0 0.0
    %118 = vmatpush1.msra.mxu0 0.0
    %119 = vmatprep.subr.mxu0 0.0
    %120 = vmatpush1.msra.mxu0 0.0
    %121 = vmatprep.subr.mxu0 0.0
    %122 = vmatpush1.msra.mxu0 0.0
    %123 = vmatprep.subr.mxu0 0.0
    %124 = vmatpush1.msra.mxu0 0.0
    %125 = vmatprep.subr.mxu0 0.0
    %126 = vmatpush1.msra.mxu0 0.0
    %127 = vmatprep.subr.mxu0 0.0
    %128 = vmatpush1.msra.mxu0 0.0
    %129 = vmatprep.subr.mxu0 0.0
    %130 = vmatpush1.msra.mxu0 0.0
    %131 = vmatprep.subr.mxu0 0.0
    %132 = vmatpush1.msra.mxu0 0.0
    %133 = vmatprep.subr.mxu0 0.0
    %134 = vmatpush1.msra.mxu0 0.0
    %135 = vmatprep.subr.mxu0 0.0
    %136 = vmatpush1.msra.mxu0 0.0
    %137 = vmatprep.subr.mxu0 0.0
    %138 = vmatpush1.msra.mxu0 0.0
    %139 = vmatprep.mubr.f32.mxu0 0.0
    %140 = vmatmul.mubr.f32.gmra.mrb[0].mxu0 %v64
    %v141 = vpop.f32.mrb[0].mxu0
    %v142 = vadd.f32 %v45, %v141
    %v143 = vpop.f32.mrb[0].mxu0
    %144 = vmatprep.mubr.f32.mxu0 0.0
    %145 = vmatmul.mubr.f32.gmra.mrb[0].mxu0 %v67
    %v146 = vpop.f32.mrb[0].mxu0
    %v147 = vadd.f32 %v50, %v146
    %v148 = vpop.f32.mrb[0].mxu0
    %149 = vmatprep.mubr.f32.mxu0 0.0
    %150 = vmatmul.mubr.f32.gmra.mrb[0].mxu0 %v70
    %v151 = vpop.f32.mrb[0].mxu0
    %v152 = vadd.f32 %v55, %v151
    %v153 = vpop.f32.mrb[0].mxu0
    %154 = vmatprep.mubr.f32.mxu0 0.0
    %155 = vmatmul.mubr.f32.gmra.mrb[0].mxu0 %v73
    %v156 = vpop.f32.mrb[0].mxu0
    %v157 = vadd.f32 %v60, %v156
    %v158 = vpop.f32.mrb[0].mxu0
    %159 = vdwg.mxu0
    %v160 = vmax.f32 %v142, 0.0
    %v161 = vmax.f32 %v147, 0.0
    %v162 = vmax.f32 %v152, 0.0
    %v163 = vmax.f32 %v157, 0.0
    %v164 = vld [vmem:[%s3] sm:$0xff]
    %v165 = vld [vmem:[%s3 + $0x8] sm:$0xff]
    %v166 = vld [vmem:[%s3 + $0x10] sm:$0xff]
    %v167 = vld [vmem:[%s3 + $0x18] sm:$0xff]
    %v168 = vld [vmem:[%s4] sm:$0xff]
    %v169 = vld [vmem:[%s4 + $0x8] sm:$0xff]
    %v170 = vld [vmem:[%s4 + $0x10] sm:$0xff]
    %v171 = vld [vmem:[%s4 + $0x18] sm:$0xff]
    %173 = vset.pattern.permute.xlu0 0
    %174 = vperm.xlu0 %173, %v168
    %v175 = vpop.permute.xlu0 %174
    %178 = vset.pattern.permute.xlu0 0
    %179 = vperm.xlu0 %178, %v169
    %v180 = vpop.permute.xlu0 %179
    %183 = vset.pattern.permute.xlu0 0
    %184 = vperm.xlu0 %183, %v170
    %v185 = vpop.permute.xlu0 %184
    %188 = vset.pattern.permute.xlu0 0
    %189 = vperm.xlu0 %188, %v171
    %v190 = vpop.permute.xlu0 %189
    %vm192 = vcmask 261120
    %v194 = vsel %vm192, %v164, 0
    %v197 = vsel %vm192, %v165, 0
    %v200 = vsel %vm192, %v166, 0
    %v203 = vsel %vm192, %v167, 0
    %205 = vmatprep.subr.mxu0 0.0
    %206 = vmatpush1.msra.mxu0 %v160
    %207 = vmatprep.subr.mxu0 0.0
    %208 = vmatpush1.msra.mxu0 %v161
    %209 = vmatprep.subr.mxu0 0.0
    %210 = vmatpush1.msra.mxu0 %v162
    %211 = vmatprep.subr.mxu0 0.0
    %212 = vmatpush1.msra.mxu0 %v163
    %213 = vmatprep.subr.mxu0 0.0
    %214 = vmatpush1.msra.mxu0 0.0
    %215 = vmatprep.subr.mxu0 0.0
    %216 = vmatpush1.msra.mxu0 0.0
    %217 = vmatprep.subr.mxu0 0.0
    %218 = vmatpush1.msra.mxu0 0.0
    %219 = vmatprep.subr.mxu0 0.0
    %220 = vmatpush1.msra.mxu0 0.0
    %221 = vmatprep.subr.mxu0 0.0
    %222 = vmatpush1.msra.mxu0 0.0
    %223 = vmatprep.subr.mxu0 0.0
    %224 = vmatpush1.msra.mxu0 0.0
    %225 = vmatprep.subr.mxu0 0.0
    %226 = vmatpush1.msra.mxu0 0.0
    %227 = vmatprep.subr.mxu0 0.0
    %228 = vmatpush1.msra.mxu0 0.0
    %229 = vmatprep.subr.mxu0 0.0
    %230 = vmatpush1.msra.mxu0 0.0
    %231 = vmatprep.subr.mxu0 0.0
    %232 = vmatpush1.msra.mxu0 0.0
    %233 = vmatprep.subr.mxu0 0.0
    %234 = vmatpush1.msra.mxu0 0.0
    %235 = vmatprep.subr.mxu0 0.0
    %236 = vmatpush1.msra.mxu0 0.0
    %237 = vmatprep.subr.mxu0 0.0
    %238 = vmatpush1.msra.mxu0 0.0
    %239 = vmatprep.subr.mxu0 0.0
    %240 = vmatpush1.msra.mxu0 0.0
    %241 = vmatprep.subr.mxu0 0.0
    %242 = vmatpush1.msra.mxu0 0.0
    %243 = vmatprep.subr.mxu0 0.0
    %244 = vmatpush1.msra.mxu0 0.0
    %245 = vmatprep.subr.mxu0 0.0
    %246 = vmatpush1.msra.mxu0 0.0
    %247 = vmatprep.subr.mxu0 0.0
    %248 = vmatpush1.msra.mxu0 0.0
    %249 = vmatprep.subr.mxu0 0.0
    %250 = vmatpush1.msra.mxu0 0.0
    %251 = vmatprep.subr.mxu0 0.0
    %252 = vmatpush1.msra.mxu0 0.0
    %253 = vmatprep.subr.mxu0 0.0
    %254 = vmatpush1.msra.mxu0 0.0
    %255 = vmatprep.subr.mxu0 0.0
    %256 = vmatpush1.msra.mxu0 0.0
    %257 = vmatprep.subr.mxu0 0.0
    %258 = vmatpush1.msra.mxu0 0.0
    %259 = vmatprep.subr.mxu0 0.0
    %260 = vmatpush1.msra.mxu0 0.0
    %261 = vmatprep.subr.mxu0 0.0
    %262 = vmatpush1.msra.mxu0 0.0
    %263 = vmatprep.subr.mxu0 0.0
    %264 = vmatpush1.msra.mxu0 0.0
    %265 = vmatprep.subr.mxu0 0.0
    %266 = vmatpush1.msra.mxu0 0.0
    %267 = vmatprep.subr.mxu0 0.0
    %268 = vmatpush1.msra.mxu0 0.0
    %269 = vmatprep.mubr.f32.mxu0 0.0
    %270 = vmatmul.mubr.f32.gmra.mrb[0].mxu0 %v194
    %v271 = vpop.f32.mrb[0].mxu0
    %v272 = vadd.f32 %v175, %v271
    %v273 = vpop.f32.mrb[0].mxu0
    %274 = vmatprep.mubr.f32.mxu0 0.0
    %275 = vmatmul.mubr.f32.gmra.mrb[0].mxu0 %v197
    %v276 = vpop.f32.mrb[0].mxu0
    %v277 = vadd.f32 %v180, %v276
    %v278 = vpop.f32.mrb[0].mxu0
    %279 = vmatprep.mubr.f32.mxu0 0.0
    %280 = vmatmul.mubr.f32.gmra.mrb[0].mxu0 %v200
    %v281 = vpop.f32.mrb[0].mxu0
    %v282 = vadd.f32 %v185, %v281
    %v283 = vpop.f32.mrb[0].mxu0
    %284 = vmatprep.mubr.f32.mxu0 0.0
    %285 = vmatmul.mubr.f32.gmra.mrb[0].mxu0 %v203
    %v286 = vpop.f32.mrb[0].mxu0
    %v287 = vadd.f32 %v190, %v286
    %v288 = vpop.f32.mrb[0].mxu0
    %289 = vdwg.mxu0
    %v290 = vmax.f32 %v272, 0.0
    %v291 = vmax.f32 %v277, 0.0
    %v292 = vmax.f32 %v282, 0.0
    %v293 = vmax.f32 %v287, 0.0
    %v294 = vld [vmem:[%s5] sm:$0xff]
    %v295 = vld [vmem:[%s5 + $0x8] sm:$0xff]
    %v296 = vld [vmem:[%s5 + $0x10] sm:$0xff]
    %v297 = vld [vmem:[%s5 + $0x18] sm:$0xff]
    %v298 = vld [vmem:[%s6] sm:$0xff]
    %v299 = vld [vmem:[%s6 + $0x8] sm:$0xff]
    %v300 = vld [vmem:[%s6 + $0x10] sm:$0xff]
    %v301 = vld [vmem:[%s6 + $0x18] sm:$0xff]
    %303 = vset.pattern.permute.xlu0 0
    %304 = vperm.xlu0 %303, %v298
    %v305 = vpop.permute.xlu0 %304
    %308 = vset.pattern.permute.xlu0 0
    %309 = vperm.xlu0 %308, %v299
    %v310 = vpop.permute.xlu0 %309
    %313 = vset.pattern.permute.xlu0 0
    %314 = vperm.xlu0 %313, %v300
    %v315 = vpop.permute.xlu0 %314
    %318 = vset.pattern.permute.xlu0 0
    %319 = vperm.xlu0 %318, %v301
    %v320 = vpop.permute.xlu0 %319
    %v323 = vsel %vm192, %v294, 0
    %v326 = vsel %vm192, %v295, 0
    %v329 = vsel %vm192, %v296, 0
    %v332 = vsel %vm192, %v297, 0
    %334 = vmatprep.subr.mxu0 0.0
    %335 = vmatpush1.msra.mxu0 %v290
    %336 = vmatprep.subr.mxu0 0.0
    %337 = vmatpush1.msra.mxu0 %v291
    %338 = vmatprep.subr.mxu0 0.0
    %339 = vmatpush1.msra.mxu0 %v292
    %340 = vmatprep.subr.mxu0 0.0
    %341 = vmatpush1.msra.mxu0 %v293
    %342 = vmatprep.subr.mxu0 0.0
    %343 = vmatpush1.msra.mxu0 0.0
    %344 = vmatprep.subr.mxu0 0.0
    %345 = vmatpush1.msra.mxu0 0.0
    %346 = vmatprep.subr.mxu0 0.0
    %347 = vmatpush1.msra.mxu0 0.0
    %348 = vmatprep.subr.mxu0 0.0
    %349 = vmatpush1.msra.mxu0 0.0
    %350 = vmatprep.subr.mxu0 0.0
    %351 = vmatpush1.msra.mxu0 0.0
    %352 = vmatprep.subr.mxu0 0.0
    %353 = vmatpush1.msra.mxu0 0.0
    %354 = vmatprep.subr.mxu0 0.0
    %355 = vmatpush1.msra.mxu0 0.0
    %356 = vmatprep.subr.mxu0 0.0
    %357 = vmatpush1.msra.mxu0 0.0
    %358 = vmatprep.subr.mxu0 0.0
    %359 = vmatpush1.msra.mxu0 0.0
    %360 = vmatprep.subr.mxu0 0.0
    %361 = vmatpush1.msra.mxu0 0.0
    %362 = vmatprep.subr.mxu0 0.0
    %363 = vmatpush1.msra.mxu0 0.0
    %364 = vmatprep.subr.mxu0 0.0
    %365 = vmatpush1.msra.mxu0 0.0
    %366 = vmatprep.subr.mxu0 0.0
    %367 = vmatpush1.msra.mxu0 0.0
    %368 = vmatprep.subr.mxu0 0.0
    %369 = vmatpush1.msra.mxu0 0.0
    %370 = vmatprep.subr.mxu0 0.0
    %371 = vmatpush1.msra.mxu0 0.0
    %372 = vmatprep.subr.mxu0 0.0
    %373 = vmatpush1.msra.mxu0 0.0
    %374 = vmatprep.subr.mxu0 0.0
    %375 = vmatpush1.msra.mxu0 0.0
    %376 = vmatprep.subr.mxu0 0.0
    %377 = vmatpush1.msra.mxu0 0.0
    %378 = vmatprep.subr.mxu0 0.0
    %379 = vmatpush1.msra.mxu0 0.0
    %380 = vmatprep.subr.mxu0 0.0
    %381 = vmatpush1.msra.mxu0 0.0
    %382 = vmatprep.subr.mxu0 0.0
    %383 = vmatpush1.msra.mxu0 0.0
    %384 = vmatprep.subr.mxu0 0.0
    %385 = vmatpush1.msra.mxu0 0.0
    %386 = vmatprep.subr.mxu0 0.0
    %387 = vmatpush1.msra.mxu0 0.0
    %388 = vmatprep.subr.mxu0 0.0
    %389 = vmatpush1.msra.mxu0 0.0
    %390 = vmatprep.subr.mxu0 0.0
    %391 = vmatpush1.msra.mxu0 0.0
    %392 = vmatprep.subr.mxu0 0.0
    %393 = vmatpush1.msra.mxu0 0.0
    %394 = vmatprep.subr.mxu0 0.0
    %395 = vmatpush1.msra.mxu0 0.0
    %396 = vmatprep.subr.mxu0 0.0
    %397 = vmatpush1.msra.mxu0 0.0
    %398 = vmatprep.mubr.f32.mxu0 0.0
    %399 = vmatmul.mubr.f32.gmra.mrb[0].mxu0 %v323
    %v400 = vpop.f32.mrb[0].mxu0
    %v401 = vadd.f32 %v305, %v400
    %v402 = vpop.f32.mrb[0].mxu0
    %403 = vmatprep.mubr.f32.mxu0 0.0
    %404 = vmatmul.mubr.f32.gmra.mrb[0].mxu0 %v326
    %v405 = vpop.f32.mrb[0].mxu0
    %v406 = vadd.f32 %v310, %v405
    %v407 = vpop.f32.mrb[0].mxu0
    %408 = vmatprep.mubr.f32.mxu0 0.0
    %409 = vmatmul.mubr.f32.gmra.mrb[0].mxu0 %v329
    %v410 = vpop.f32.mrb[0].mxu0
    %v411 = vadd.f32 %v315, %v410
    %v412 = vpop.f32.mrb[0].mxu0
    %413 = vmatprep.mubr.f32.mxu0 0.0
    %414 = vmatmul.mubr.f32.gmra.mrb[0].mxu0 %v332
    %v415 = vpop.f32.mrb[0].mxu0
    %v416 = vadd.f32 %v320, %v415
    %v417 = vpop.f32.mrb[0].mxu0
    %418 = vdwg.mxu0
    %v419 = vmax.f32 %v401, 0.0
    %v420 = vmax.f32 %v406, 0.0
    %v421 = vmax.f32 %v411, 0.0
    %v422 = vmax.f32 %v416, 0.0
    %v423 = vld [vmem:[%s7] sm:$0xff]
    %v424 = vld [vmem:[%s8] sm:$0xff]
    %426 = vset.pattern.permute.xlu0 0
    %427 = vperm.xlu0 %426, %v424
    %v428 = vpop.permute.xlu0 %427
    %v431 = vsel %vm192, %v423, 0
    %433 = vmatprep.subr.mxu0 0.0
    %434 = vmatpush1.msra.mxu0 %v419
    %435 = vmatprep.subr.mxu0 0.0
    %436 = vmatpush1.msra.mxu0 %v420
    %437 = vmatprep.subr.mxu0 0.0
    %438 = vmatpush1.msra.mxu0 %v421
    %439 = vmatprep.subr.mxu0 0.0
    %440 = vmatpush1.msra.mxu0 %v422
    %441 = vmatprep.subr.mxu0 0.0
    %442 = vmatpush1.msra.mxu0 0.0
    %443 = vmatprep.subr.mxu0 0.0
    %444 = vmatpush1.msra.mxu0 0.0
    %445 = vmatprep.subr.mxu0 0.0
    %446 = vmatpush1.msra.mxu0 0.0
    %447 = vmatprep.subr.mxu0 0.0
    %448 = vmatpush1.msra.mxu0 0.0
    %449 = vmatprep.subr.mxu0 0.0
    %450 = vmatpush1.msra.mxu0 0.0
    %451 = vmatprep.subr.mxu0 0.0
    %452 = vmatpush1.msra.mxu0 0.0
    %453 = vmatprep.subr.mxu0 0.0
    %454 = vmatpush1.msra.mxu0 0.0
    %455 = vmatprep.subr.mxu0 0.0
    %456 = vmatpush1.msra.mxu0 0.0
    %457 = vmatprep.subr.mxu0 0.0
    %458 = vmatpush1.msra.mxu0 0.0
    %459 = vmatprep.subr.mxu0 0.0
    %460 = vmatpush1.msra.mxu0 0.0
    %461 = vmatprep.subr.mxu0 0.0
    %462 = vmatpush1.msra.mxu0 0.0
    %463 = vmatprep.subr.mxu0 0.0
    %464 = vmatpush1.msra.mxu0 0.0
    %465 = vmatprep.subr.mxu0 0.0
    %466 = vmatpush1.msra.mxu0 0.0
    %467 = vmatprep.subr.mxu0 0.0
    %468 = vmatpush1.msra.mxu0 0.0
    %469 = vmatprep.subr.mxu0 0.0
    %470 = vmatpush1.msra.mxu0 0.0
    %471 = vmatprep.subr.mxu0 0.0
    %472 = vmatpush1.msra.mxu0 0.0
    %473 = vmatprep.subr.mxu0 0.0
    %474 = vmatpush1.msra.mxu0 0.0
    %475 = vmatprep.subr.mxu0 0.0
    %476 = vmatpush1.msra.mxu0 0.0
    %477 = vmatprep.subr.mxu0 0.0
    %478 = vmatpush1.msra.mxu0 0.0
    %479 = vmatprep.subr.mxu0 0.0
    %480 = vmatpush1.msra.mxu0 0.0
    %481 = vmatprep.subr.mxu0 0.0
    %482 = vmatpush1.msra.mxu0 0.0
    %483 = vmatprep.subr.mxu0 0.0
    %484 = vmatpush1.msra.mxu0 0.0
    %485 = vmatprep.subr.mxu0 0.0
    %486 = vmatpush1.msra.mxu0 0.0
    %487 = vmatprep.subr.mxu0 0.0
    %488 = vmatpush1.msra.mxu0 0.0
    %489 = vmatprep.subr.mxu0 0.0
    %490 = vmatpush1.msra.mxu0 0.0
    %491 = vmatprep.subr.mxu0 0.0
    %492 = vmatpush1.msra.mxu0 0.0
    %493 = vmatprep.subr.mxu0 0.0
    %494 = vmatpush1.msra.mxu0 0.0
    %495 = vmatprep.subr.mxu0 0.0
    %496 = vmatpush1.msra.mxu0 0.0
    %497 = vmatprep.mubr.f32.mxu0 0.0
    %498 = vmatmul.mubr.f32.gmra.mrb[0].mxu0 %v431
    %v499 = vpop.f32.mrb[0].mxu0
    %v500 = vadd.f32 %v428, %v499
    %v501 = vpop.f32.mrb[0].mxu0
    %502 = vdwg.mxu0
    %v503 = vmax.f32 %v500, 0.0
    %504 = vst [vmem:[#allocation2] sm:$0xff] %v503
    // Predicated region
    $region38: #{tpu_custom_call.1} parent=1 // pred_check
      _
    $region39: #{tpu_custom_call.1} parent=1 // pred_check_branch
      %506 = sbr.rel (0) target = $region41
    $region40: #{tpu_custom_call.1} parent=1 // pred_region
      %s508 = ssub.s32 128, 128
      %509 = vsyncadd [#allocation3], %s508
      %s511 = sshll.u32 [#allocation2], 4
      %s512 = int_to_ptr.vmem [resolvable:$true] %s511
      %514 = dma.vmem_to_hbm [thread:$0]  %s512, 128, %s9, [#allocation3]
    $region41: #{tpu_custom_call.1} parent=1 // pred_fallthru
      _
    // Predicated region
    $region42: #{tpu_custom_call.1} parent=1 // pred_check
      _
    $region43: #{tpu_custom_call.1} parent=1 // pred_check_branch
      %516 = sbr.rel (0) target = $region45
    $region44: #{tpu_custom_call.1} parent=1 // pred_region
      %517 = dma.done [#allocation3], 128
    $region45: #{tpu_custom_call.1} parent=1 // pred_fallthru
      _
    %518 = vsyncpa [#allocation3], 1

</llo_original>
